<compile_context>
chip_gen: v7x
topology: tpu7x:2x2x1
jax: 0.10.0
libtpu: 0.0.40
codegen_flags: <defaults>
</compile_context>

<pallas_src>
import numpy as np
import jax
import jax.numpy as jnp
from jax.experimental import pallas as pl
from jax.experimental.pallas import tpu as pltpu

_MIB = 1024 * 1024


def _bilinear_resize_matrix(out_size: int, in_size: int) -> np.ndarray:
    """Row-stochastic (out_size, in_size) bilinear interpolation matrix
    (half-pixel centers, align_corners=False). Host-side numpy constant."""
    scale = in_size / out_size
    i = np.arange(out_size, dtype=np.float64)
    src = np.clip((i + 0.5) * scale - 0.5, 0.0, in_size - 1)
    i0 = np.floor(src).astype(np.int64)
    frac = src - i0
    i1 = np.minimum(i0 + 1, in_size - 1)
    m = np.zeros((out_size, in_size), dtype=np.float64)
    rows = np.arange(out_size)
    np.add.at(m, (rows, i0), 1.0 - frac)
    np.add.at(m, (rows, i1), frac)
    return m.astype(np.float32)


def _make_kernel(height_first: bool, tb: int, c: int):
    def kernel(x_ref, rh_ref, rwc_ref, o_ref):
        # x_ref:   (TB, H_in, W_in*C)    uint8  interleaved-channel HWC frames
        # rh_ref:  (H_out, H_in)         bf16   height-resize matrix
        # rwc_ref: (C, W_in*C, W_out)    bf16   channel-strided width matrices
        #                                       (includes the 1/255 scale)
        # o_ref:   (TB, C, H_out, W_out) f32
        rh = rh_ref[...]                                   # shared across frames

        @pl.loop(0, tb)
        def _(b):
            # Cast in-kernel: HBM read stays 1 B/elem; only one frame is ever
            # upcast at a time (small, bounded VMEM transient).
            xb = x_ref[b].astype(jnp.bfloat16)             # (H_in, W_in*C)
            if height_first:
                t1 = jnp.dot(rh, xb, preferred_element_type=jnp.float32)
                t1 = t1.astype(jnp.bfloat16)               # (H_out, W_in*C)
                for ch in range(c):                        # width resize + C split
                    o_ref[b, ch] = jnp.dot(
                        t1, rwc_ref[ch], preferred_element_type=jnp.float32)
            else:
                for ch in range(c):                        # width resize + C split
                    t1 = jnp.dot(
                        xb, rwc_ref[ch], preferred_element_type=jnp.float32)
                    t1 = t1.astype(jnp.bfloat16)           # (H_in, W_out)
                    o_ref[b, ch] = jnp.dot(
                        rh, t1, preferred_element_type=jnp.float32)

    return kernel


def _round_up(x: int, m: int) -> int:
    return -(-x // m) * m


def _step_vmem_bytes(tb, c, h_in, w_in, h_out, w_out, height_first):
    """Per-grid-step VMEM footprint, including (sublane, 128) tile padding."""
    wc = w_in * c
    in_blk = tb * _round_up(h_in, 32) * _round_up(wc, 128)               # uint8
    out_blk = tb * c * _round_up(h_out, 8) * _round_up(w_out, 128) * 4   # f32
    rh_blk = _round_up(h_out, 16) * _round_up(h_in, 128) * 2             # bf16
    rwc_blk = c * _round_up(wc, 16) * _round_up(w_out, 128) * 2          # bf16
    # per-frame transients inside the pl.loop body
    xb = _round_up(h_in, 16) * _round_up(wc, 128) * 2                    # bf16 frame
    if height_first:
        t1 = _round_up(h_out, 16) * _round_up(wc, 128) * (2 + 4)         # bf16 + f32
    else:
        t1 = _round_up(h_in, 16) * _round_up(w_out, 128) * (2 + 4)
    res = _round_up(h_out, 8) * _round_up(w_out, 128) * 4                # f32 result
    return 2 * (in_blk + out_blk + rh_blk + rwc_blk) + xb + t1 + res


def _choose_frame_batch(t, c, h_in, w_in, h_out, w_out, height_first, budget_bytes):
    fits = [tb for tb in range(1, t + 1)
            if t % tb == 0
            and _step_vmem_bytes(tb, c, h_in, w_in, h_out, w_out,
                                 height_first) <= budget_bytes]
    if not fits:
        # Even TB=1 exceeds the budget (very large frames). Proceed with TB=1.
        # TODO(synk): add a second grid axis over H_out row tiles (each tile
        #             only needs a contiguous H_in window) for e.g. 1080p.
        return 1
    min_grid = 2 if t >= 2 else 1      # >= 2 steps: megacore sharding + pipelining
    pipelined = [tb for tb in fits if t // tb >= min_grid]
    return max(pipelined) if pipelined else max(fits)


def _vmem_capacity_bytes() -> int:
    try:
        cap = getattr(pltpu.get_tpu_info(), "vmem_capacity_bytes", None)
        if cap:
            return int(cap)
    except Exception:
        pass
    return 64 * _MIB   # conservative default (v7x per-TensorCore VMEM)


def resize_normalize(video_hwc: jnp.ndarray, size) -> jnp.ndarray:
    """video_hwc: (T, H_in, W_in, C) uint8 (or int/float) channel-last frames.
    Returns (T, C, H_out, W_out) float32 with values in [0, 1]."""
    h_out, w_out = size
    t, h_in, w_in, c = video_hwc.shape

    # Free metadata reshape only - NO HWC->CHW transpose pass over HBM.
    x = video_hwc.reshape(t, h_in, w_in * c)

    # Resize matrices (host-side constants); /255 folded into the width side.
    rh_f32 = _bilinear_resize_matrix(h_out, h_in)                # (H_out, H_in)
    rwt_f32 = _bilinear_resize_matrix(w_out, w_in).T / 255.0     # (W_in, W_out)
    # Channel-strided width matrices: rwc[ch, w*c + ch, n] = RW[w, n] / 255.
    # One matmul per channel both resizes W and de-interleaves that channel.
    rwc_f32 = np.zeros((c, w_in * c, w_out), np.float32)
    for ch in range(c):
        rwc_f32[ch, np.arange(w_in) * c + ch, :] = rwt_f32
    rh = jnp.asarray(rh_f32, dtype=jnp.bfloat16)
    rwc = jnp.asarray(rwc_f32, dtype=jnp.bfloat16)

    # Contraction-order choice (MXU FLOP proxy; width stage carries K=W_in*C).
    wf = c * h_in * w_in * w_out + h_out * h_in * w_out
    hf = h_out * h_in * w_in + c * h_out * w_in * w_out
    height_first = hf <= wf

    vmem_cap = _vmem_capacity_bytes()
    budget = min(max(vmem_cap * 3 // 8, 16 * _MIB), 56 * _MIB)   # ~24M v7x, ~48M v5e/v6e
    vmem_limit = int(min(vmem_cap * 3 // 4, 100 * _MIB))

    tb = _choose_frame_batch(t, c, h_in, w_in, h_out, w_out, height_first, budget)

    grid_spec = pltpu.PrefetchScalarGridSpec(
        num_scalar_prefetch=0,
        grid=(t // tb,),
        in_specs=[
            pl.BlockSpec((tb, h_in, w_in * c), lambda i: (i, 0, 0)),
            pl.BlockSpec((h_out, h_in), lambda i: (0, 0)),
            pl.BlockSpec((c, w_in * c, w_out), lambda i: (0, 0, 0)),
        ],
        out_specs=pl.BlockSpec((tb, c, h_out, w_out), lambda i: (i, 0, 0, 0)),
    )

    # TODO(synk): for production W_out not a multiple of 128 (e.g. 224), a
    #             padded / flattened lane-dense output layout would remove
    #             masked tail stores; natural (T,C,H_out,W_out) layout kept.
    return pl.pallas_call(
        _make_kernel(height_first, tb, c),
        out_shape=jax.ShapeDtypeStruct((t, c, h_out, w_out), jnp.float32),
        grid_spec=grid_spec,
        compiler_params=pltpu.CompilerParams(
            dimension_semantics=("parallel",),
            vmem_limit_bytes=vmem_limit),
    )(x, rh, rwc)


if __name__ == "__main__":
    key = jax.random.PRNGKey(0)
    # Small video: 2 frames, 16x16 spatial, 3 channels (RGB), uint8 values.
    T, H_IN, W_IN, C = 2, 16, 16, 3
    SIZE = (8, 8)
    video = jax.random.randint(key, (T, H_IN, W_IN, C), 0, 256,
                               dtype=jnp.int32).astype(jnp.uint8)

    out = jax.block_until_ready(resize_normalize(video, SIZE))

    # Plain-JAX f32 reference with the same bilinear matrices.
    rh_ref = jnp.asarray(_bilinear_resize_matrix(SIZE[0], H_IN))
    rw_ref = jnp.asarray(_bilinear_resize_matrix(SIZE[1], W_IN))
    ref = jnp.einsum('oh,thwc,wn->tcon', rh_ref,
                     video.astype(jnp.float32), rw_ref.T) / 255.0

    assert out.shape == (T, C, SIZE[0], SIZE[1])
    assert out.dtype == jnp.float32
    # bf16 operands on the MXU -> ~1e-3 absolute accuracy on [0,1] outputs.
    assert jnp.allclose(out, ref, atol=1e-2), float(jnp.max(jnp.abs(out - ref)))
    print("KERNEL_OK")
</pallas_src>

<mosaic_0001>
module attributes {stable_mosaic.version = 11 : i64} {
  func.func @kernel(%arg0: i32, %arg1: memref<1x16x48xi8, #tpu.memory_space<vmem>>, %arg2: memref<8x16xbf16, #tpu.memory_space<vmem>>, %arg3: memref<3x48x8xbf16, #tpu.memory_space<vmem>>, %arg4: memref<1x3x8x8xf32, #tpu.memory_space<vmem>>) attributes {dimension_semantics = [#tpu.dimension_semantics<parallel>], iteration_bounds = array<i64: 2>, scalar_prefetch = 0 : i64, scratch_operands = 0 : i64, tpu.core_type = #tpu.core_type<tc>, window_params = [{transform_indices = @transform_0, window_bounds = array<i64: 1, 16, 48>}, {pipeline_mode = #tpu.pipeline_mode<synchronous>, transform_indices = @transform_1, window_bounds = array<i64: 8, 16>}, {pipeline_mode = #tpu.pipeline_mode<synchronous>, transform_indices = @transform_2, window_bounds = array<i64: 3, 48, 8>}, {transform_indices = @transform_3, window_bounds = array<i64: 1, 3, 8, 8>}]} {
    %c0 = arith.constant 0 : index
    %c0_0 = arith.constant 0 : index
    %0 = vector.load %arg2[%c0, %c0_0] : memref<8x16xbf16, #tpu.memory_space<vmem>>, vector<8x16xbf16>
    %c0_i32 = arith.constant 0 : i32
    %c1_i32 = arith.constant 1 : i32
    %1 = arith.muli %c0_i32, %c1_i32 : i32
    %c0_i32_1 = arith.constant 0 : i32
    %2 = arith.addi %c0_i32_1, %1 : i32
    %3 = arith.index_cast %2 : i32 to index
    %c0_2 = arith.constant 0 : index
    %c0_3 = arith.constant 0 : index
    %4 = vector.load %arg1[%3, %c0_2, %c0_3] : memref<1x16x48xi8, #tpu.memory_space<vmem>>, vector<1x16x48xi8>
    %5 = vector.shape_cast %4 : vector<1x16x48xi8> to vector<16x48xi8>
    %6 = arith.uitofp %5 : vector<16x48xi8> to vector<16x48xbf16>
    %cst = arith.constant dense<0.000000e+00> : vector<8x48xf32>
    %7 = tpu.matmul %0, %6, %cst {dimension_numbers = #tpu.dot_dimension_numbers<[1], [0], [0], [1], [0, 0, 1, 1], [], []>} : vector<8x16xbf16>, vector<16x48xbf16>, vector<8x48xf32> -> vector<8x48xf32>
    %8 = arith.truncf %7 : vector<8x48xf32> to vector<8x48xbf16>
    %c0_4 = arith.constant 0 : index
    %c0_5 = arith.constant 0 : index
    %c0_6 = arith.constant 0 : index
    %9 = vector.load %arg3[%c0_4, %c0_5, %c0_6] : memref<3x48x8xbf16, #tpu.memory_space<vmem>>, vector<1x48x8xbf16>
    %10 = vector.shape_cast %9 : vector<1x48x8xbf16> to vector<48x8xbf16>
    %cst_7 = arith.constant dense<0.000000e+00> : vector<8x8xf32>
    %11 = tpu.matmul %8, %10, %cst_7 {dimension_numbers = #tpu.dot_dimension_numbers<[1], [0], [0], [1], [0, 0, 1, 1], [], []>} : vector<8x48xbf16>, vector<48x8xbf16>, vector<8x8xf32> -> vector<8x8xf32>
    %12 = arith.index_cast %2 : i32 to index
    %c0_8 = arith.constant 0 : index
    %c0_9 = arith.constant 0 : index
    %c0_10 = arith.constant 0 : index
    %13 = vector.load %arg4[%12, %c0_8, %c0_9, %c0_10] : memref<1x3x8x8xf32, #tpu.memory_space<vmem>>, vector<1x1x8x8xf32>
    %14 = vector.shape_cast %13 : vector<1x1x8x8xf32> to vector<8x8xf32>
    %15 = vector.shape_cast %11 : vector<8x8xf32> to vector<1x1x8x8xf32>
    tpu.vector_store %arg4[%12, %c0_8, %c0_9, %c0_10], %15 {strides = array<i32>} : memref<1x3x8x8xf32, #tpu.memory_space<vmem>>, vector<1x1x8x8xf32>,
    %c1 = arith.constant 1 : index
    %c0_11 = arith.constant 0 : index
    %c0_12 = arith.constant 0 : index
    %16 = vector.load %arg3[%c1, %c0_11, %c0_12] : memref<3x48x8xbf16, #tpu.memory_space<vmem>>, vector<1x48x8xbf16>
    %17 = vector.shape_cast %16 : vector<1x48x8xbf16> to vector<48x8xbf16>
    %cst_13 = arith.constant dense<0.000000e+00> : vector<8x8xf32>
    %18 = tpu.matmul %8, %17, %cst_13 {dimension_numbers = #tpu.dot_dimension_numbers<[1], [0], [0], [1], [0, 0, 1, 1], [], []>} : vector<8x48xbf16>, vector<48x8xbf16>, vector<8x8xf32> -> vector<8x8xf32>
    %19 = arith.index_cast %2 : i32 to index
    %c1_14 = arith.constant 1 : index
    %c0_15 = arith.constant 0 : index
    %c0_16 = arith.constant 0 : index
    %20 = vector.load %arg4[%19, %c1_14, %c0_15, %c0_16] : memref<1x3x8x8xf32, #tpu.memory_space<vmem>>, vector<1x1x8x8xf32>
    %21 = vector.shape_cast %20 : vector<1x1x8x8xf32> to vector<8x8xf32>
    %22 = vector.shape_cast %18 : vector<8x8xf32> to vector<1x1x8x8xf32>
    tpu.vector_store %arg4[%19, %c1_14, %c0_15, %c0_16], %22 {strides = array<i32>} : memref<1x3x8x8xf32, #tpu.memory_space<vmem>>, vector<1x1x8x8xf32>,
    %c2 = arith.constant 2 : index
    %c0_17 = arith.constant 0 : index
    %c0_18 = arith.constant 0 : index
    %23 = vector.load %arg3[%c2, %c0_17, %c0_18] : memref<3x48x8xbf16, #tpu.memory_space<vmem>>, vector<1x48x8xbf16>
    %24 = vector.shape_cast %23 : vector<1x48x8xbf16> to vector<48x8xbf16>
    %cst_19 = arith.constant dense<0.000000e+00> : vector<8x8xf32>
    %25 = tpu.matmul %8, %24, %cst_19 {dimension_numbers = #tpu.dot_dimension_numbers<[1], [0], [0], [1], [0, 0, 1, 1], [], []>} : vector<8x48xbf16>, vector<48x8xbf16>, vector<8x8xf32> -> vector<8x8xf32>
    %26 = arith.index_cast %2 : i32 to index
    %c2_20 = arith.constant 2 : index
    %c0_21 = arith.constant 0 : index
    %c0_22 = arith.constant 0 : index
    %27 = vector.load %arg4[%26, %c2_20, %c0_21, %c0_22] : memref<1x3x8x8xf32, #tpu.memory_space<vmem>>, vector<1x1x8x8xf32>
    %28 = vector.shape_cast %27 : vector<1x1x8x8xf32> to vector<8x8xf32>
    %29 = vector.shape_cast %25 : vector<8x8xf32> to vector<1x1x8x8xf32>
    tpu.vector_store %arg4[%26, %c2_20, %c0_21, %c0_22], %29 {strides = array<i32>} : memref<1x3x8x8xf32, #tpu.memory_space<vmem>>, vector<1x1x8x8xf32>,
    %c1_i32_23 = arith.constant 1 : i32
    return
  }
  func.func @transform_0(%arg0: i32) -> (i32, i32, i32) {
    %c0_i32 = arith.constant 0 : i32
    %c0_i32_0 = arith.constant 0 : i32
    %c0_i32_1 = arith.constant 0 : i32
    return %arg0, %c0_i32, %c0_i32_0 : i32, i32, i32
  }
  func.func @transform_1(%arg0: i32) -> (i32, i32) {
    %c0_i32 = arith.constant 0 : i32
    %c0_i32_0 = arith.constant 0 : i32
    %c0_i32_1 = arith.constant 0 : i32
    return %c0_i32, %c0_i32_0 : i32, i32
  }
  func.func @transform_2(%arg0: i32) -> (i32, i32, i32) {
    %c0_i32 = arith.constant 0 : i32
    %c0_i32_0 = arith.constant 0 : i32
    %c0_i32_1 = arith.constant 0 : i32
    %c0_i32_2 = arith.constant 0 : i32
    return %c0_i32, %c0_i32_0, %c0_i32_1 : i32, i32, i32
  }
  func.func @transform_3(%arg0: i32) -> (i32, i32, i32, i32) {
    %c0_i32 = arith.constant 0 : i32
    %c0_i32_0 = arith.constant 0 : i32
    %c0_i32_1 = arith.constant 0 : i32
    %c0_i32_2 = arith.constant 0 : i32
    return %arg0, %c0_i32, %c0_i32_0, %c0_i32_1 : i32, i32, i32, i32
  }
}

</mosaic_0001>

<llo_original>
// kernel: tpu_custom_call.1
$region0: #{tpu_custom_call.1}
  #allocation0 [shape = 'u32[]', space=smem, size = 0x4, offset = 0x4, fixed_abs, tag = 'smem constant byte address 0x4 - core index']
  #allocation1 [shape = 'u32[144,128]{1,0:T(1,128)}', space=vmem, size = 0x12000, scoped, tag = 'internal scratch']
  %s0 = inlined_call_operand.vmem [shape: u8[2,16,48], index: 0, kind: input, shape index: {}]
  %s1 = inlined_call_operand.vmem [shape: bf16[8,16], index: 1, kind: input, shape index: {}]
  %s2 = inlined_call_operand.vmem [shape: bf16[3,48,8], index: 2, kind: input, shape index: {}]
  %s3 = inlined_call_operand.hbm [shape: f32[2,3,8,8], index: 3, kind: output, shape index: {}]
  %s4 = sld [smem:[#allocation0]]
  $region45: #{tpu_custom_call.1} parent=0
    _
  %s6 = ssub.s32 1, %s4
  %s7 = scalar_select 0, %s6, %s4
  $region1: #{tpu_custom_call.1} parent=0
    #allocation2 [shape = 'u8[24576]{0}', space=vmem, size = 0x6000, scoped, tag = 'output window, operand 0']
    #allocation3 [shape = 's32[2]{0}', space=sflag, size = 0x8, scoped, tag = 'scoped memory for tpu_custom_call.1']
    %8 = vsyncpa [#allocation3], 0
    %s9 = scalar_lea.sflag [#allocation3], 1
    %10 = vsyncpa %s9, 0
    loop: start=0, step=1, limit=4
    $region2: #{tpu_custom_call.1} parent=1 // loop_pre_header
      _
    $region3: #{tpu_custom_call.1} parent=1 // loop_header
      %s12 = sphi 0, %s16
      %p13 = scmp.ge.s32.totalorder %s12, 4
      %s22 = sphi 0, %s24
      %s25 = sphi 0, %s22
      %s26 = sphi 0, %s25
      %s42 = sphi 0, %s26
      %s46 = sphi 0, %s46
      %s48 = sphi 0, %s46
      %s49 = sphi 0, %s48
      %s63 = sphi 0, %s49
      %s67 = sphi 0, %s67
      %s69 = sphi 0, %s67
      %s70 = sphi 0, %s69
      %s84 = sphi 0, %s70
      %s90 = sphi 0, %s92
      %s93 = sphi 0, %s90
      %s94 = sphi 0, %s93
      %s110 = sphi 0, %s94
    $region4: #{tpu_custom_call.1} parent=1 // loop_header_branch
      %15 = sbr.rel (%p13) target = $region8
    $region5: #{tpu_custom_call.1} parent=1 // loop_body
      %s17 = ssub.s32 %s12, 1
      %s18 = ssub.s32 %s12, 2
      %s19 = sadd.s32 %s12, 1
      %s20 = ssub.s32 %s12, %s19
      %p21 = scmp.eq.s32.totalorder %s20, 0
      %s23 = sadd.s32 %s22, 1
      %s24 = scalar_select %p21, %s22, %s23
      %p27 = pneg %p21
      %p28 = scmp.eq.s32.totalorder %s12, 1
      %p29 = por %p27, %p28
      %p30 = scmp.ne.s32.totalorder %s22, %s25
      %p31 = scmp.eq.s32.totalorder %s12, 0
      %p32 = por %p30, %p31
      %p33 = scmp.ne.s32.totalorder %s22, %s25
      %p34 = scmp.eq.s32.totalorder %s17, 1
      %p35 = por %p33, %p34
      %p36 = scmp.ne.s32.totalorder %s25, %s26
      %p37 = scmp.eq.s32.totalorder %s17, 0
      %p38 = por %p36, %p37
      %p39 = scmp.ne.s32.totalorder %s25, %s26
      %p40 = scmp.eq.s32.totalorder %s18, 1
      %p41 = por %p39, %p40
      %p43 = scmp.ne.s32.totalorder %s26, %s42
      %p44 = scmp.eq.s32.totalorder %s18, 0
      %p45 = por %p43, %p44
      %s47 = sadd.s32 %s46, 1
      %p50 = scmp.eq.s32.totalorder %s12, 1
      %p51 = scmp.ne.s32.totalorder %s46, %s48
      %p52 = scmp.eq.s32.totalorder %s12, 0
      %p53 = por %p51, %p52
      %p54 = scmp.ne.s32.totalorder %s46, %s48
      %p55 = scmp.eq.s32.totalorder %s17, 1
      %p56 = por %p54, %p55
      %p57 = scmp.ne.s32.totalorder %s48, %s49
      %p58 = scmp.eq.s32.totalorder %s17, 0
      %p59 = por %p57, %p58
      %p60 = scmp.ne.s32.totalorder %s48, %s49
      %p61 = scmp.eq.s32.totalorder %s18, 1
      %p62 = por %p60, %p61
      %p64 = scmp.ne.s32.totalorder %s49, %s63
      %p65 = scmp.eq.s32.totalorder %s18, 0
      %p66 = por %p64, %p65
      %s68 = sadd.s32 %s67, 1
      %p71 = scmp.eq.s32.totalorder %s12, 1
      %p72 = scmp.ne.s32.totalorder %s67, %s69
      %p73 = scmp.eq.s32.totalorder %s12, 0
      %p74 = por %p72, %p73
      %p75 = scmp.ne.s32.totalorder %s67, %s69
      %p76 = scmp.eq.s32.totalorder %s17, 1
      %p77 = por %p75, %p76
      %p78 = scmp.ne.s32.totalorder %s69, %s70
      %p79 = scmp.eq.s32.totalorder %s17, 0
      %p80 = por %p78, %p79
      %p81 = scmp.ne.s32.totalorder %s69, %s70
      %p82 = scmp.eq.s32.totalorder %s18, 1
      %p83 = por %p81, %p82
      %p85 = scmp.ne.s32.totalorder %s70, %s84
      %p86 = scmp.eq.s32.totalorder %s18, 0
      %p87 = por %p85, %p86
      %s88 = ssub.s32 %s12, %s19
      %p89 = scmp.eq.s32.totalorder %s88, 0
      %s91 = sadd.s32 %s90, 1
      %s92 = scalar_select %p89, %s90, %s91
      %p95 = pneg %p89
      %p96 = scmp.eq.s32.totalorder %s12, 1
      %p97 = por %p95, %p96
      %p98 = scmp.ne.s32.totalorder %s90, %s93
      %p99 = scmp.eq.s32.totalorder %s12, 0
      %p100 = por %p98, %p99
      %p101 = scmp.ne.s32.totalorder %s90, %s93
      %p102 = scmp.eq.s32.totalorder %s17, 1
      %p103 = por %p101, %p102
      %p104 = scmp.ne.s32.totalorder %s93, %s94
      %p105 = scmp.eq.s32.totalorder %s17, 0
      %p106 = por %p104, %p105
      %p107 = scmp.ne.s32.totalorder %s93, %s94
      %p108 = scmp.eq.s32.totalorder %s18, 1
      %p109 = por %p107, %p108
      %p111 = scmp.ne.s32.totalorder %s94, %s110
      %p112 = scmp.eq.s32.totalorder %s18, 0
      %p113 = por %p111, %p112
      %p114 = scmp.le.s32.totalorder 1, %s12
      %p115 = scmp.lt.s32.totalorder %s12, 3
      %p116 = pnand %p114, %p115
      %p117 = pneg %p116
      // Predicated region
      $region9: #{tpu_custom_call.1} parent=5 // pred_check
        _
      $region10: #{tpu_custom_call.1} parent=5 // pred_check_branch
        %119 = sbr.rel (%p116) target = $region12
      $region11: #{tpu_custom_call.1} parent=5 // pred_region
        %s120 = ssub.s32 %s12, 1
        // Predicated region
        $region13: #{tpu_custom_call.1} parent=11 // pred_check
          %p121 = pneg %p59
        $region14: #{tpu_custom_call.1} parent=11 // pred_check_branch
          %123 = sbr.rel (%p121) target = $region16
        $region15: #{tpu_custom_call.1} parent=11 // pred_region
          _
        $region16: #{tpu_custom_call.1} parent=11 // pred_fallthru
          _
        // Predicated region
        $region17: #{tpu_custom_call.1} parent=11 // pred_check
          %p124 = pneg %p80
        $region18: #{tpu_custom_call.1} parent=11 // pred_check_branch
          %126 = sbr.rel (%p124) target = $region20
        $region19: #{tpu_custom_call.1} parent=11 // pred_region
          _
        $region20: #{tpu_custom_call.1} parent=11 // pred_fallthru
          _
      $region12: #{tpu_custom_call.1} parent=5 // pred_fallthru
        _
      %p127 = scmp.lt.s32.totalorder %s12, 2
      // Predicated region
      $region21: #{tpu_custom_call.1} parent=5 // pred_check
        %p128 = pneg %p127
      $region22: #{tpu_custom_call.1} parent=5 // pred_check_branch
        %130 = sbr.rel (%p128) target = $region24
      $region23: #{tpu_custom_call.1} parent=5 // pred_region
        // Predicated region
        $region25: #{tpu_custom_call.1} parent=23 // pred_check
          %p131 = pneg %p32
        $region26: #{tpu_custom_call.1} parent=23 // pred_check_branch
          %133 = sbr.rel (%p131) target = $region28
        $region27: #{tpu_custom_call.1} parent=23 // pred_region
          %p134 = scmp.lt.s32.totalorder %s12, 1
          %s135 = scalar_select %p134, %s12, 1
          %s136 = smul.addr %s135, 2
          %s137 = smul.addr %s136, 2
          %s138 = scalar_lea.vmem %s0, %s137
        $region28: #{tpu_custom_call.1} parent=23 // pred_fallthru
          _
      $region24: #{tpu_custom_call.1} parent=5 // pred_fallthru
        _
      %p139 = scmp.le.s32.totalorder 1, %s12
      %p140 = scmp.lt.s32.totalorder %s12, 3
      %p141 = pnand %p139, %p140
      %p142 = pneg %p141
      // Predicated region
      $region29: #{tpu_custom_call.1} parent=5 // pred_check
        _
      $region30: #{tpu_custom_call.1} parent=5 // pred_check_branch
        %144 = sbr.rel (%p141) target = $region32
      $region31: #{tpu_custom_call.1} parent=5 // pred_region
        %s145 = ssub.s32 %s12, 1
        %p146 = scmp.lt.s32.totalorder %s17, 1
        %s147 = scalar_select %p146, %s17, 1
        %s148 = smul.addr %s147, 2
        %s149 = smul.addr %s148, 2
        %s150 = scalar_lea.vmem %s0, %s149
        %p151 = pneg %p38
        %p152 = pneg %p35
        %p153 = pneg %p59
        %p154 = pneg %p56
        %p155 = pneg %p80
        %p156 = pneg %p77
        %p157 = pneg %p106
        %p158 = pneg %p103
        %s159 = sand.u32 %s93, 1
        %s160 = scalar_lea.sflag [#allocation3], %s159
        %s161 = sand.u32 %s93, 1
        %s162 = smul.addr %s161, 24
        %s163 = scalar_lea.vmem [#allocation2], %s162
        %p164 = scmp.lt.s32.totalorder %s17, 1
        %s165 = scalar_select %p164, %s17, 1
        %s166 = smul.addr %s165, 2
        %s167 = smul.addr %s166, 2
        %s168 = scalar_lea.vmem %s0, %s167
        %v170 = vld [vmem:[%s1] sm:$0xf]
        %v171 = vld [vmem:[%s168] sm:$0x3]
        %v172 = vld [vmem:[%s168 + $0x2] sm:$0x3]
        %v173 = vunpack.c.l.u8.bf16 %v171
        %v174 = vunpack.c.l.u8.bf16 %v172
        %v177 = vunpack.c.l.b16 %v173
        %v178 = vunpack.c.l.b16 %v174
        %v179 = vpack.c.b16 %v178, %v177
        %vm181 = vcmask 130048
        %v183 = vsel %vm181, %v170, 0
        %185 = vmatprep.subr.bf16.mxu0 0
        %186 = vmatpush1.bf16.msra.mxu0 %v179
        %187 = vmatprep.subr.bf16.mxu0 0
        %188 = vmatpush1.bf16.msra.mxu0 0
        %189 = vmatprep.subr.bf16.mxu0 0
        %190 = vmatpush1.bf16.msra.mxu0 0
        %191 = vmatprep.subr.bf16.mxu0 0
        %192 = vmatpush1.bf16.msra.mxu0 0
        %193 = vmatprep.subr.bf16.mxu0 0
        %194 = vmatpush1.bf16.msra.mxu0 0
        %195 = vmatprep.subr.bf16.mxu0 0
        %196 = vmatpush1.bf16.msra.mxu0 0
        %197 = vmatprep.subr.bf16.mxu0 0
        %198 = vmatpush1.bf16.msra.mxu0 0
        %199 = vmatprep.subr.bf16.mxu0 0
        %200 = vmatpush1.bf16.msra.mxu0 0
        %201 = vmatprep.subr.bf16.mxu0 0
        %202 = vmatpush1.bf16.msra.mxu0 0
        %203 = vmatprep.subr.bf16.mxu0 0
        %204 = vmatpush1.bf16.msra.mxu0 0
        %205 = vmatprep.subr.bf16.mxu0 0
        %206 = vmatpush1.bf16.msra.mxu0 0
        %207 = vmatprep.subr.bf16.mxu0 0
        %208 = vmatpush1.bf16.msra.mxu0 0
        %209 = vmatprep.subr.bf16.mxu0 0
        %210 = vmatpush1.bf16.msra.mxu0 0
        %211 = vmatprep.subr.bf16.mxu0 0
        %212 = vmatpush1.bf16.msra.mxu0 0
        %213 = vmatprep.subr.bf16.mxu0 0
        %214 = vmatpush1.bf16.msra.mxu0 0
        %215 = vmatprep.subr.bf16.mxu0 0
        %216 = vmatpush1.bf16.msra.mxu0 0
        %217 = vmatprep.mubr.bf16.mxu0 0
        %218 = vmatmul.mubr.bf16.gmra.mrb[0].mxu0 %v183
        %v219 = vpop.f32.mrb[0].mxu0
        %v220 = vadd.f32 0.0, %v219
        %v221 = vpop.f32.mrb[0].mxu0
        %v222 = vpop.f32.mrb[0].mxu0
        %v223 = vpop.f32.mrb[0].mxu0
        %224 = vdwg.mxu0
        %v225 = vpack.c.bf16 %v220, %v220
        %v226 = vld [vmem:[%s2] sm:$0xf]
        %v227 = vld [vmem:[%s2 + $0x4] sm:$0xf]
        %v228 = vld [vmem:[%s2 + $0x8] sm:$0xf]
        %v229 = vld [vmem:[%s2 + $0xc] sm:$0xf]
        %v230 = vld [vmem:[%s2 + $0x10] sm:$0xf]
        %v231 = vld [vmem:[%s2 + $0x14] sm:$0xf]
        %v238 = vunpack.c.l.b16 %v226
        %v239 = vunpack.c.l.b16 %v227
        %v240 = vunpack.c.l.b16 %v228
        %v241 = vunpack.c.l.b16 %v229
        %v242 = vunpack.c.l.b16 %v230
        %v243 = vunpack.c.l.b16 %v231
        %v244 = vpack.c.b16 %v239, %v238
        %v245 = vpack.c.b16 %v241, %v240
        %v246 = vpack.c.b16 %v243, %v242
        %vm250 = vcmask 392192
        %v252 = vsel %vm250, %v225, 0
        %254 = vmatprep.subr.bf16.mxu0 0
        %255 = vmatpush1.bf16.msra.mxu0 %v244
        %256 = vmatprep.subr.bf16.mxu0 0
        %257 = vmatpush1.bf16.msra.mxu0 %v245
        %258 = vmatprep.subr.bf16.mxu0 0
        %259 = vmatpush1.bf16.msra.mxu0 %v246
        %260 = vmatprep.subr.bf16.mxu0 0
        %261 = vmatpush1.bf16.msra.mxu0 0
        %262 = vmatprep.subr.bf16.mxu0 0
        %263 = vmatpush1.bf16.msra.mxu0 0
        %264 = vmatprep.subr.bf16.mxu0 0
        %265 = vmatpush1.bf16.msra.mxu0 0
        %266 = vmatprep.subr.bf16.mxu0 0
        %267 = vmatpush1.bf16.msra.mxu0 0
        %268 = vmatprep.subr.bf16.mxu0 0
        %269 = vmatpush1.bf16.msra.mxu0 0
        %270 = vmatprep.subr.bf16.mxu0 0
        %271 = vmatpush1.bf16.msra.mxu0 0
        %272 = vmatprep.subr.bf16.mxu0 0
        %273 = vmatpush1.bf16.msra.mxu0 0
        %274 = vmatprep.subr.bf16.mxu0 0
        %275 = vmatpush1.bf16.msra.mxu0 0
        %276 = vmatprep.subr.bf16.mxu0 0
        %277 = vmatpush1.bf16.msra.mxu0 0
        %278 = vmatprep.subr.bf16.mxu0 0
        %279 = vmatpush1.bf16.msra.mxu0 0
        %280 = vmatprep.subr.bf16.mxu0 0
        %281 = vmatpush1.bf16.msra.mxu0 0
        %282 = vmatprep.subr.bf16.mxu0 0
        %283 = vmatpush1.bf16.msra.mxu0 0
        %284 = vmatprep.subr.bf16.mxu0 0
        %285 = vmatpush1.bf16.msra.mxu0 0
        %286 = vmatprep.mubr.bf16.mxu0 0
        %287 = vmatmul.mubr.bf16.gmra.mrb[0].mxu0 %v252
        %v288 = vpop.f32.mrb[0].mxu0
        %v289 = vadd.f32 0.0, %v288
        %v290 = vpop.f32.mrb[0].mxu0
        %v291 = vpop.f32.mrb[0].mxu0
        %v292 = vpop.f32.mrb[0].mxu0
        %293 = vdwg.mxu0
        %vm294 = vcmask 64512
        %295 = vst.msk [vmem:[%s163] sm:$0xff] %vm294, %v289
        %s296 = scalar_lea.vmem %s2, 24
        %v297 = vld [vmem:[%s296] sm:$0xf]
        %v298 = vld [vmem:[%s296 + $0x4] sm:$0xf]
        %v299 = vld [vmem:[%s296 + $0x8] sm:$0xf]
        %v300 = vld [vmem:[%s296 + $0xc] sm:$0xf]
        %v301 = vld [vmem:[%s296 + $0x10] sm:$0xf]
        %v302 = vld [vmem:[%s296 + $0x14] sm:$0xf]
        %v309 = vunpack.c.l.b16 %v297
        %v310 = vunpack.c.l.b16 %v298
        %v311 = vunpack.c.l.b16 %v299
        %v312 = vunpack.c.l.b16 %v300
        %v313 = vunpack.c.l.b16 %v301
        %v314 = vunpack.c.l.b16 %v302
        %v315 = vpack.c.b16 %v310, %v309
        %v316 = vpack.c.b16 %v312, %v311
        %v317 = vpack.c.b16 %v314, %v313
        %321 = vmatprep.subr.bf16.mxu0 0
        %322 = vmatpush1.bf16.msra.mxu0 %v315
        %323 = vmatprep.subr.bf16.mxu0 0
        %324 = vmatpush1.bf16.msra.mxu0 %v316
        %325 = vmatprep.subr.bf16.mxu0 0
        %326 = vmatpush1.bf16.msra.mxu0 %v317
        %327 = vmatprep.subr.bf16.mxu0 0
        %328 = vmatpush1.bf16.msra.mxu0 0
        %329 = vmatprep.subr.bf16.mxu0 0
        %330 = vmatpush1.bf16.msra.mxu0 0
        %331 = vmatprep.subr.bf16.mxu0 0
        %332 = vmatpush1.bf16.msra.mxu0 0
        %333 = vmatprep.subr.bf16.mxu0 0
        %334 = vmatpush1.bf16.msra.mxu0 0
        %335 = vmatprep.subr.bf16.mxu0 0
        %336 = vmatpush1.bf16.msra.mxu0 0
        %337 = vmatprep.subr.bf16.mxu0 0
        %338 = vmatpush1.bf16.msra.mxu0 0
        %339 = vmatprep.subr.bf16.mxu0 0
        %340 = vmatpush1.bf16.msra.mxu0 0
        %341 = vmatprep.subr.bf16.mxu0 0
        %342 = vmatpush1.bf16.msra.mxu0 0
        %343 = vmatprep.subr.bf16.mxu0 0
        %344 = vmatpush1.bf16.msra.mxu0 0
        %345 = vmatprep.subr.bf16.mxu0 0
        %346 = vmatpush1.bf16.msra.mxu0 0
        %347 = vmatprep.subr.bf16.mxu0 0
        %348 = vmatpush1.bf16.msra.mxu0 0
        %349 = vmatprep.subr.bf16.mxu0 0
        %350 = vmatpush1.bf16.msra.mxu0 0
        %351 = vmatprep.subr.bf16.mxu0 0
        %352 = vmatpush1.bf16.msra.mxu0 0
        %353 = vmatprep.mubr.bf16.mxu0 0
        %354 = vmatmul.mubr.bf16.gmra.mrb[0].mxu0 %v252
        %v355 = vpop.f32.mrb[0].mxu0
        %v356 = vadd.f32 0.0, %v355
        %v357 = vpop.f32.mrb[0].mxu0
        %v358 = vpop.f32.mrb[0].mxu0
        %v359 = vpop.f32.mrb[0].mxu0
        %360 = vdwg.mxu0
        %s361 = scalar_lea.vmem %s163, 8 [#allocation2]
        %362 = vst.msk [vmem:[%s361] sm:$0xff] %vm294, %v356
        %s363 = scalar_lea.vmem %s2, 48
        %v364 = vld [vmem:[%s363] sm:$0xf]
        %v365 = vld [vmem:[%s363 + $0x4] sm:$0xf]
        %v366 = vld [vmem:[%s363 + $0x8] sm:$0xf]
        %v367 = vld [vmem:[%s363 + $0xc] sm:$0xf]
        %v368 = vld [vmem:[%s363 + $0x10] sm:$0xf]
        %v369 = vld [vmem:[%s363 + $0x14] sm:$0xf]
        %v376 = vunpack.c.l.b16 %v364
        %v377 = vunpack.c.l.b16 %v365
        %v378 = vunpack.c.l.b16 %v366
        %v379 = vunpack.c.l.b16 %v367
        %v380 = vunpack.c.l.b16 %v368
        %v381 = vunpack.c.l.b16 %v369
        %v382 = vpack.c.b16 %v377, %v376
        %v383 = vpack.c.b16 %v379, %v378
        %v384 = vpack.c.b16 %v381, %v380
        %388 = vmatprep.subr.bf16.mxu0 0
        %389 = vmatpush1.bf16.msra.mxu0 %v382
        %390 = vmatprep.subr.bf16.mxu0 0
        %391 = vmatpush1.bf16.msra.mxu0 %v383
        %392 = vmatprep.subr.bf16.mxu0 0
        %393 = vmatpush1.bf16.msra.mxu0 %v384
        %394 = vmatprep.subr.bf16.mxu0 0
        %395 = vmatpush1.bf16.msra.mxu0 0
        %396 = vmatprep.subr.bf16.mxu0 0
        %397 = vmatpush1.bf16.msra.mxu0 0
        %398 = vmatprep.subr.bf16.mxu0 0
        %399 = vmatpush1.bf16.msra.mxu0 0
        %400 = vmatprep.subr.bf16.mxu0 0
        %401 = vmatpush1.bf16.msra.mxu0 0
        %402 = vmatprep.subr.bf16.mxu0 0
        %403 = vmatpush1.bf16.msra.mxu0 0
        %404 = vmatprep.subr.bf16.mxu0 0
        %405 = vmatpush1.bf16.msra.mxu0 0
        %406 = vmatprep.subr.bf16.mxu0 0
        %407 = vmatpush1.bf16.msra.mxu0 0
        %408 = vmatprep.subr.bf16.mxu0 0
        %409 = vmatpush1.bf16.msra.mxu0 0
        %410 = vmatprep.subr.bf16.mxu0 0
        %411 = vmatpush1.bf16.msra.mxu0 0
        %412 = vmatprep.subr.bf16.mxu0 0
        %413 = vmatpush1.bf16.msra.mxu0 0
        %414 = vmatprep.subr.bf16.mxu0 0
        %415 = vmatpush1.bf16.msra.mxu0 0
        %416 = vmatprep.subr.bf16.mxu0 0
        %417 = vmatpush1.bf16.msra.mxu0 0
        %418 = vmatprep.subr.bf16.mxu0 0
        %419 = vmatpush1.bf16.msra.mxu0 0
        %420 = vmatprep.mubr.bf16.mxu0 0
        %421 = vmatmul.mubr.bf16.gmra.mrb[0].mxu0 %v252
        %v422 = vpop.f32.mrb[0].mxu0
        %v423 = vadd.f32 0.0, %v422
        %v424 = vpop.f32.mrb[0].mxu0
        %v425 = vpop.f32.mrb[0].mxu0
        %v426 = vpop.f32.mrb[0].mxu0
        %427 = vdwg.mxu0
        %s428 = scalar_lea.vmem %s163, 16 [#allocation2]
        %429 = vst.msk [vmem:[%s428] sm:$0xff] %vm294, %v423
        %s430 = sand.u32 %s93, 1
        %s431 = scalar_lea.sflag [#allocation3], %s430
        %s432 = sand.u32 %s93, 1
        %s433 = smul.addr %s432, 24
        %s434 = scalar_lea.vmem [#allocation2], %s433
        // Predicated region
        $region33: #{tpu_custom_call.1} parent=31 // pred_check
          %p435 = pneg %p103
        $region34: #{tpu_custom_call.1} parent=31 // pred_check_branch
          %437 = sbr.rel (%p435) target = $region36
        $region35: #{tpu_custom_call.1} parent=31 // pred_region
          %s439 = ssub.s32 384, 384
          %440 = vsyncadd %s431, %s439
          %s441 = smul.addr %s17, 3
          %s442 = smul.addr %s441, 128
          %s443 = scalar_lea.hbm %s3, %s442
          %s444 = sshll.u32 %s434, 4
          %s445 = int_to_ptr.vmem [resolvable:$true] %s444
          %450 = dma.vmem_to_hbm [thread:$0]  %s445, 384, %s443, %s431, 128, 128, 8
        $region36: #{tpu_custom_call.1} parent=31 // pred_fallthru
          _
      $region32: #{tpu_custom_call.1} parent=5 // pred_fallthru
        _
      %p451 = scmp.le.s32.totalorder 2, %s12
      // Predicated region
      $region37: #{tpu_custom_call.1} parent=5 // pred_check
        %p452 = pneg %p451
      $region38: #{tpu_custom_call.1} parent=5 // pred_check_branch
        %454 = sbr.rel (%p452) target = $region40
      $region39: #{tpu_custom_call.1} parent=5 // pred_region
        %s455 = ssub.s32 %s12, 2
        // Predicated region
        $region41: #{tpu_custom_call.1} parent=39 // pred_check
          %p456 = pneg %p109
        $region42: #{tpu_custom_call.1} parent=39 // pred_check_branch
          %458 = sbr.rel (%p456) target = $region44
        $region43: #{tpu_custom_call.1} parent=39 // pred_region
          %s459 = sand.u32 %s94, 1
          %s460 = scalar_lea.sflag [#allocation3], %s459
          %s461 = sand.u32 %s94, 1
          %s462 = smul.addr %s461, 24
          %s463 = scalar_lea.vmem [#allocation2], %s462
          %464 = dma.done %s460, 384
        $region44: #{tpu_custom_call.1} parent=39 // pred_fallthru
          _
      $region40: #{tpu_custom_call.1} parent=5 // pred_fallthru
        _
    $region6: #{tpu_custom_call.1} parent=1 // loop_footer
      %s16 = sadd.s32 1, %s12
    $region7: #{tpu_custom_call.1} parent=1 // loop_footer_branch
      %11 = sbr.rel target = $region3
    $region8: #{tpu_custom_call.1} parent=1 // loop_exit
      _
    %465 = vsyncpa [#allocation3], 1
    %s466 = scalar_lea.sflag [#allocation3], 1
    %467 = vsyncpa %s466, 1

</llo_original>
